<compile_context>
chip_gen: v7x
topology: tpu7x:2x2x1
jax: 0.10.0
libtpu: 0.0.40
codegen_flags: <defaults>
</compile_context>

<pallas_src>
import functools

import jax
import jax.numpy as jnp
from jax.experimental import pallas as pl
from jax.experimental.pallas import tpu as pltpu


def _pad_to(x: int, m: int) -> int:
    return ((x + m - 1) // m) * m


# --------------------------------------------------------------------------
# Kernels
# --------------------------------------------------------------------------

def _agg_project_relu_kernel(a_ref, h_ref, w_ref, o_ref, acc_ref):
    """Fused path (d_in_p <= d_out_p):  relu( (A @ H) @ W^T ), K-tiled over N.

    a_ref:   (tm, tk)        bf16 block of A_norm (padded)
    h_ref:   (tk, d_in_p)    f32 block of H (cast to bf16 for the MXU)
    w_ref:   (d_in_p, d_out_p) bf16 W^T (resident, constant index map)
    o_ref:   (tm, d_out_p)   f32 output
    acc_ref: (tm, d_in_p)    f32 accumulator scratch
    """
    k = pl.program_id(1)

    @pl.when(k == 0)
    def _():
        acc_ref[...] = jnp.zeros_like(acc_ref)

    acc_ref[...] += jnp.dot(
        a_ref[...], h_ref[...].astype(jnp.bfloat16),
        preferred_element_type=jnp.float32)

    @pl.when(k == pl.num_programs(1) - 1)
    def _():
        y = jnp.dot(acc_ref[...].astype(jnp.bfloat16), w_ref[...],
                    preferred_element_type=jnp.float32)
        o_ref[...] = jnp.maximum(y, 0.0).astype(o_ref.dtype)


def _project_kernel(h_ref, w_ref, o_ref):
    """H' = H @ W^T (no activation), row-tiled.  Used when the layer narrows."""
    o_ref[...] = jnp.dot(
        h_ref[...].astype(jnp.bfloat16), w_ref[...],
        preferred_element_type=jnp.float32).astype(o_ref.dtype)


def _agg_relu_kernel(a_ref, hw_ref, o_ref, acc_ref):
    """relu(A @ H'), K-tiled over N with an f32 accumulator."""
    k = pl.program_id(1)

    @pl.when(k == 0)
    def _():
        acc_ref[...] = jnp.zeros_like(acc_ref)

    acc_ref[...] += jnp.dot(a_ref[...], hw_ref[...],
                            preferred_element_type=jnp.float32)

    @pl.when(k == pl.num_programs(1) - 1)
    def _():
        o_ref[...] = jnp.maximum(acc_ref[...], 0.0).astype(o_ref.dtype)


# --------------------------------------------------------------------------
# Layer wrapper (operates on padded arrays)
# --------------------------------------------------------------------------

def _gcn_layer_padded(a_p, h_p, w_t, *, tile):
    """One GCN layer on padded operands: relu(A_p @ H_p @ W^T).

    a_p: (N_p, N_p) bf16 padded normalized adjacency
    h_p: (N_p, d_in_p) f32 padded features
    w_t: (d_in, d_out) f32 unpadded W^T of the Linear layer
    Returns padded f32 (N_p, d_out_p).
    """
    N_p = a_p.shape[0]
    d_in_p = h_p.shape[1]
    d_in, d_out = w_t.shape
    d_out_p = _pad_to(d_out, 128)

    w_p = jnp.pad(w_t, ((0, d_in_p - d_in), (0, d_out_p - d_out))
                  ).astype(jnp.bfloat16)

    grid_rows = N_p // tile
    grid_k = N_p // tile
    cp_2d = pltpu.CompilerParams(
        dimension_semantics=("parallel", "arbitrary"),
        vmem_limit_bytes=64 << 20)

    if d_out_p < d_in_p:
        # Project first (fewer FLOPs / less traffic when the layer narrows):
        #   H' = H @ W^T   then   out = relu(A @ H')
        hw = pl.pallas_call(
            _project_kernel,
            out_shape=jax.ShapeDtypeStruct((N_p, d_out_p), jnp.bfloat16),
            grid_spec=pltpu.PrefetchScalarGridSpec(
                num_scalar_prefetch=0,
                grid=(grid_rows,),
                in_specs=[
                    pl.BlockSpec((tile, d_in_p), lambda i: (i, 0)),
                    pl.BlockSpec((d_in_p, d_out_p), lambda i: (0, 0)),
                ],
                out_specs=pl.BlockSpec((tile, d_out_p), lambda i: (i, 0)),
            ),
            compiler_params=pltpu.CompilerParams(
                dimension_semantics=("parallel",),
                vmem_limit_bytes=64 << 20),
        )(h_p, w_p)

        return pl.pallas_call(
            _agg_relu_kernel,
            out_shape=jax.ShapeDtypeStruct((N_p, d_out_p), jnp.float32),
            grid_spec=pltpu.PrefetchScalarGridSpec(
                num_scalar_prefetch=0,
                grid=(grid_rows, grid_k),
                in_specs=[
                    pl.BlockSpec((tile, tile), lambda i, k: (i, k)),
                    pl.BlockSpec((tile, d_out_p), lambda i, k: (k, 0)),
                ],
                out_specs=pl.BlockSpec((tile, d_out_p), lambda i, k: (i, 0)),
                scratch_shapes=[pltpu.VMEM((tile, d_out_p), jnp.float32)],
            ),
            compiler_params=cp_2d,
        )(a_p, hw)

    # Fused path: acc = A @ H (K-tiled), finalize relu(acc @ W^T).
    return pl.pallas_call(
        _agg_project_relu_kernel,
        out_shape=jax.ShapeDtypeStruct((N_p, d_out_p), jnp.float32),
        grid_spec=pltpu.PrefetchScalarGridSpec(
            num_scalar_prefetch=0,
            grid=(grid_rows, grid_k),
            in_specs=[
                pl.BlockSpec((tile, tile), lambda i, k: (i, k)),        # A block
                pl.BlockSpec((tile, d_in_p), lambda i, k: (k, 0)),      # H block
                pl.BlockSpec((d_in_p, d_out_p), lambda i, k: (0, 0)),   # W^T
            ],
            out_specs=pl.BlockSpec((tile, d_out_p), lambda i, k: (i, 0)),
            scratch_shapes=[pltpu.VMEM((tile, d_in_p), jnp.float32)],
        ),
        compiler_params=cp_2d,
    )(a_p, h_p, w_p)


# --------------------------------------------------------------------------
# Encoder forward (pads once, chains layers, slices padding off at the end)
# --------------------------------------------------------------------------

@functools.partial(jax.jit, static_argnames=("tile_n",))
def encoder_forward(a_norm, x, params, *, tile_n=256):
    """Pallas implementation of Encoder.forward (relu activation, dropout=0).

    tile_n: row/reduction tile (multiple of 128). 256 is a good default for
            v6e / v7x; use 128 on v5e (single vector-store slot).
    """
    N = a_norm.shape[0]
    d_final = params[-1].shape[1]

    n_128 = _pad_to(N, 128)
    tile = min(tile_n, n_128)
    N_p = _pad_to(n_128, tile)

    # A_norm cast to bf16 once for the whole forward (dominant N^2 term).
    a_p = jnp.pad(a_norm, ((0, N_p - N), (0, N_p - N))).astype(jnp.bfloat16)
    d_in0 = x.shape[1]
    h = jnp.pad(x, ((0, N_p - N), (0, _pad_to(d_in0, 128) - d_in0)))

    for w_t in params:
        h = _gcn_layer_padded(a_p, h, w_t, tile=tile)

    return h[:N, :d_final]


def init_encoder_params(key, in_dim, hidden_dim, num_layers=2):
    """Deterministic init mimicking nn.Linear default (uniform +/- 1/sqrt(fan_in))."""
    params = []
    for i in range(num_layers):
        fan_in = in_dim if i == 0 else hidden_dim
        key, sub = jax.random.split(key)
        bound = 1.0 / jnp.sqrt(fan_in)
        # PyTorch W has shape (hidden_dim, fan_in); we store W^T = (fan_in, hidden_dim).
        w = jax.random.uniform(sub, (hidden_dim, fan_in), jnp.float32, -bound, bound)
        params.append(w.T)
    return params


def encoder_forward_ref(a_norm, x, params):
    """Pure-JAX reference mirroring the kernel's bf16-operand / f32-accumulate math."""
    bf16 = jnp.bfloat16
    a = a_norm.astype(bf16)
    h = x
    for w_t in params:
        d_in, d_out = w_t.shape
        hb = h.astype(bf16)
        wb = w_t.astype(bf16)
        if _pad_to(d_out, 128) < _pad_to(d_in, 128):   # project-first path
            hw = jnp.dot(hb, wb, preferred_element_type=jnp.float32).astype(bf16)
            y = jnp.dot(a, hw, preferred_element_type=jnp.float32)
        else:                                          # fused path
            ah = jnp.dot(a, hb, preferred_element_type=jnp.float32).astype(bf16)
            y = jnp.dot(ah, wb, preferred_element_type=jnp.float32)
        h = jnp.maximum(y, 0.0)
    return h


if __name__ == "__main__":
    # Small shapes implied by the module: N nodes, in_dim features, hidden_dim.
    N, in_dim, hidden_dim, num_layers = 16, 8, 32, 2

    key = jax.random.PRNGKey(0)
    k_a, k_x, k_p = jax.random.split(key, 3)

    # Row-normalized adjacency-like matrix.
    a_raw = jnp.abs(jax.random.normal(k_a, (N, N), jnp.float32)) + jnp.eye(N)
    a_norm = a_raw / jnp.sum(a_raw, axis=1, keepdims=True)

    x = jax.random.normal(k_x, (N, in_dim), jnp.float32)
    params = init_encoder_params(k_p, in_dim, hidden_dim, num_layers)

    out = jax.block_until_ready(encoder_forward(a_norm, x, params))
    ref = encoder_forward_ref(a_norm, x, params)
    assert out.shape == (N, hidden_dim)
    assert jnp.allclose(out, ref, atol=1e-2, rtol=1e-2)

    # Also exercise the "project-first" path (layer narrows: d_out_p < d_in_p).
    k_x2, k_p2 = jax.random.split(jax.random.PRNGKey(1))
    x_b = jax.random.normal(k_x2, (N, 256), jnp.float32)
    params_b = init_encoder_params(k_p2, 256, 64, num_layers=1)
    out_b = jax.block_until_ready(encoder_forward(a_norm, x_b, params_b))
    ref_b = encoder_forward_ref(a_norm, x_b, params_b)
    assert out_b.shape == (N, 64)
    assert jnp.allclose(out_b, ref_b, atol=1e-2, rtol=1e-2)

    print("KERNEL_OK")
</pallas_src>

<mosaic_0001>
module attributes {stable_mosaic.version = 11 : i64} {
  func.func @_agg_project_relu_kernel(%arg0: i32, %arg1: i32, %arg2: memref<128x128xbf16, #tpu.memory_space<vmem>>, %arg3: memref<128x128xf32, #tpu.memory_space<vmem>>, %arg4: memref<128x128xbf16, #tpu.memory_space<vmem>>, %arg5: memref<128x128xf32, #tpu.memory_space<vmem>>, %arg6: memref<128x128xf32, #tpu.memory_space<vmem>>) attributes {dimension_semantics = [#tpu.dimension_semantics<parallel>, #tpu.dimension_semantics<arbitrary>], iteration_bounds = array<i64: 1, 1>, scalar_prefetch = 0 : i64, scratch_operands = 1 : i64, tpu.core_type = #tpu.core_type<tc>, window_params = [{transform_indices = @transform_0, window_bounds = array<i64: 128, 128>}, {transform_indices = @transform_1, window_bounds = array<i64: 128, 128>}, {pipeline_mode = #tpu.pipeline_mode<synchronous>, transform_indices = @transform_2, window_bounds = array<i64: 128, 128>}, {transform_indices = @transform_3, window_bounds = array<i64: 128, 128>}]} {
    %c0_i32 = arith.constant 0 : i32
    %0 = arith.cmpi eq, %arg1, %c0_i32 : i32
    %1 = arith.extui %0 : i1 to i32
    %c0_i32_0 = arith.constant 0 : i32
    %2 = arith.cmpi ne, %1, %c0_i32_0 : i32
    scf.if %2 {
      %cst_10 = arith.constant 0.000000e+00 : f32
      %13 = vector.broadcast %cst_10 : f32 to vector<128x128xf32>
      %c0_11 = arith.constant 0 : index
      %c0_12 = arith.constant 0 : index
      %14 = vector.load %arg6[%c0_11, %c0_12] : memref<128x128xf32, #tpu.memory_space<vmem>>, vector<128x128xf32>
      tpu.vector_store %arg6[%c0_11, %c0_12], %13 {strides = array<i32>} : memref<128x128xf32, #tpu.memory_space<vmem>>, vector<128x128xf32>,
    } else {
    }
    %c0 = arith.constant 0 : index
    %c0_1 = arith.constant 0 : index
    %3 = vector.load %arg6[%c0, %c0_1] : memref<128x128xf32, #tpu.memory_space<vmem>>, vector<128x128xf32>
    %c0_2 = arith.constant 0 : index
    %c0_3 = arith.constant 0 : index
    %4 = vector.load %arg2[%c0_2, %c0_3] : memref<128x128xbf16, #tpu.memory_space<vmem>>, vector<128x128xbf16>
    %c0_4 = arith.constant 0 : index
    %c0_5 = arith.constant 0 : index
    %5 = vector.load %arg3[%c0_4, %c0_5] : memref<128x128xf32, #tpu.memory_space<vmem>>, vector<128x128xf32>
    %6 = arith.truncf %5 : vector<128x128xf32> to vector<128x128xbf16>
    %cst = arith.constant dense<0.000000e+00> : vector<128x128xf32>
    %7 = tpu.matmul %4, %6, %cst {dimension_numbers = #tpu.dot_dimension_numbers<[1], [0], [0], [1], [0, 0, 1, 1], [], []>} : vector<128x128xbf16>, vector<128x128xbf16>, vector<128x128xf32> -> vector<128x128xf32>
    %8 = arith.addf %3, %7 : vector<128x128xf32>
    %c0_6 = arith.constant 0 : index
    %c0_7 = arith.constant 0 : index
    %9 = vector.load %arg6[%c0_6, %c0_7] : memref<128x128xf32, #tpu.memory_space<vmem>>, vector<128x128xf32>
    tpu.vector_store %arg6[%c0_6, %c0_7], %8 {strides = array<i32>} : memref<128x128xf32, #tpu.memory_space<vmem>>, vector<128x128xf32>,
    %c0_i32_8 = arith.constant 0 : i32
    %10 = arith.cmpi eq, %arg1, %c0_i32_8 : i32
    %11 = arith.extui %10 : i1 to i32
    %c0_i32_9 = arith.constant 0 : i32
    %12 = arith.cmpi ne, %11, %c0_i32_9 : i32
    scf.if %12 {
      %c0_10 = arith.constant 0 : index
      %c0_11 = arith.constant 0 : index
      %13 = vector.load %arg6[%c0_10, %c0_11] : memref<128x128xf32, #tpu.memory_space<vmem>>, vector<128x128xf32>
      %14 = arith.truncf %13 : vector<128x128xf32> to vector<128x128xbf16>
      %c0_12 = arith.constant 0 : index
      %c0_13 = arith.constant 0 : index
      %15 = vector.load %arg4[%c0_12, %c0_13] : memref<128x128xbf16, #tpu.memory_space<vmem>>, vector<128x128xbf16>
      %cst_14 = arith.constant dense<0.000000e+00> : vector<128x128xf32>
      %16 = tpu.matmul %14, %15, %cst_14 {dimension_numbers = #tpu.dot_dimension_numbers<[1], [0], [0], [1], [0, 0, 1, 1], [], []>} : vector<128x128xbf16>, vector<128x128xbf16>, vector<128x128xf32> -> vector<128x128xf32>
      %cst_15 = arith.constant 0.000000e+00 : f32
      %17 = vector.broadcast %cst_15 : f32 to vector<128x128xf32>
      %18 = arith.maximumf %16, %17 : vector<128x128xf32>
      %c0_16 = arith.constant 0 : index
      %c0_17 = arith.constant 0 : index
      %19 = vector.load %arg5[%c0_16, %c0_17] : memref<128x128xf32, #tpu.memory_space<vmem>>, vector<128x128xf32>
      tpu.vector_store %arg5[%c0_16, %c0_17], %18 {strides = array<i32>} : memref<128x128xf32, #tpu.memory_space<vmem>>, vector<128x128xf32>,
    } else {
    }
    return
  }
  func.func @transform_0(%arg0: i32, %arg1: i32) -> (i32, i32) {
    %c0_i32 = arith.constant 0 : i32
    return %arg0, %arg1 : i32, i32
  }
  func.func @transform_1(%arg0: i32, %arg1: i32) -> (i32, i32) {
    %c0_i32 = arith.constant 0 : i32
    %c0_i32_0 = arith.constant 0 : i32
    return %arg1, %c0_i32 : i32, i32
  }
  func.func @transform_2(%arg0: i32, %arg1: i32) -> (i32, i32) {
    %c0_i32 = arith.constant 0 : i32
    %c0_i32_0 = arith.constant 0 : i32
    %c0_i32_1 = arith.constant 0 : i32
    return %c0_i32, %c0_i32_0 : i32, i32
  }
  func.func @transform_3(%arg0: i32, %arg1: i32) -> (i32, i32) {
    %c0_i32 = arith.constant 0 : i32
    %c0_i32_0 = arith.constant 0 : i32
    return %arg0, %c0_i32 : i32, i32
  }
}

</mosaic_0001>

<llo_original>
// kernel: encoder_forward.2
$region0: #{encoder_forward.2}
  #allocation0 [shape = 'u32[]', space=smem, size = 0x4, offset = 0x4, fixed_abs, tag = 'smem constant byte address 0x4 - core index']
  #allocation1 [shape = 'u32[144,128]{1,0:T(1,128)}', space=vmem, size = 0x12000, scoped, tag = 'internal scratch']
  #allocation2 [shape = 'f32[128,128]{1,0:T(8,128)}', space=vmem, size = 0x10000, scoped, tag = 'scratch operand']
  %s0 = inlined_call_operand.hbm [shape: bf16[128,128], index: 0, kind: input, shape index: {}]
  %s1 = inlined_call_operand.hbm [shape: f32[128,128], index: 1, kind: input, shape index: {}]
  %s2 = inlined_call_operand.hbm [shape: bf16[128,128], index: 2, kind: input, shape index: {}]
  %s3 = inlined_call_operand.hbm [shape: f32[128,128], index: 3, kind: output, shape index: {}]
  %s4 = sld [smem:[#allocation0]]
  $region42: #{encoder_forward.2} parent=0
    _
  %s6 = ssub.s32 1, %s4
  %s7 = scalar_select 0, %s6, %s4
  $region1: #{encoder_forward.2} parent=0
    #allocation3 [shape = 'u8[32768]{0}', space=vmem, size = 0x8000, scoped, tag = 'input window, operand 0, single buffered']
    #allocation4 [shape = 's32[1]{0}', space=sflag, size = 0x4, scoped, tag = 'scoped memory for encoder_forward.2']
    #allocation5 [shape = 's32[1]{0}', space=sflag, size = 0x4, scoped, tag = 'scoped memory for encoder_forward.2']
    #allocation6 [shape = 'u8[65536]{0}', space=vmem, size = 0x10000, scoped, tag = 'input window, operand 1, single buffered']
    #allocation7 [shape = 's32[1]{0}', space=sflag, size = 0x4, scoped, tag = 'scoped memory for encoder_forward.2']
    #allocation8 [shape = 'u8[32768]{0}', space=vmem, size = 0x8000, scoped, tag = 'input window, operand 2, single buffered']
    #allocation9 [shape = 'u8[65536]{0}', space=vmem, size = 0x10000, scoped, tag = 'output window, operand 0, single buffered']
    %8 = vsyncpa [#allocation4], 0
    %9 = vsyncpa [#allocation7], 0
    %10 = vsyncpa [#allocation5], 0
    // Predicated region
    $region2: #{encoder_forward.2} parent=1 // pred_check
      _
    $region3: #{encoder_forward.2} parent=1 // pred_check_branch
      %12 = sbr.rel (0) target = $region5
    $region4: #{encoder_forward.2} parent=1 // pred_region
      %s14 = ssub.s32 1024, 1024
      %15 = vsyncadd [#allocation4], %s14
      %s16 = sshll.u32 [#allocation3], 4
      %s17 = int_to_ptr.vmem [resolvable:$true] %s16
      %22 = dma.hbm_to_vmem [thread:$0]  %s0, 1024, %s17, [#allocation4], 64, 64, 4
    $region5: #{encoder_forward.2} parent=1 // pred_fallthru
      _
    // Predicated region
    $region6: #{encoder_forward.2} parent=1 // pred_check
      _
    $region7: #{encoder_forward.2} parent=1 // pred_check_branch
      %24 = sbr.rel (0) target = $region9
    $region8: #{encoder_forward.2} parent=1 // pred_region
      %s26 = ssub.s32 2048, 2048
      %27 = vsyncadd [#allocation7], %s26
      %s28 = sshll.u32 [#allocation6], 4
      %s29 = int_to_ptr.vmem [resolvable:$true] %s28
      %34 = dma.hbm_to_vmem [thread:$0]  %s1, 2048, %s29, [#allocation7], 128, 128, 8
    $region9: #{encoder_forward.2} parent=1 // pred_fallthru
      _
    // Predicated region
    $region10: #{encoder_forward.2} parent=1 // pred_check
      _
    $region11: #{encoder_forward.2} parent=1 // pred_check_branch
      %36 = sbr.rel (0) target = $region13
    $region12: #{encoder_forward.2} parent=1 // pred_region
      %s38 = ssub.s32 1024, 1024
      %39 = vsyncadd [#allocation7], %s38
      %s40 = sshll.u32 [#allocation8], 4
      %s41 = int_to_ptr.vmem [resolvable:$true] %s40
      %46 = dma.hbm_to_vmem [thread:$0]  %s2, 1024, %s41, [#allocation7], 64, 64, 4
    $region13: #{encoder_forward.2} parent=1 // pred_fallthru
      _
    // Predicated region
    $region14: #{encoder_forward.2} parent=1 // pred_check
      _
    $region15: #{encoder_forward.2} parent=1 // pred_check_branch
      %48 = sbr.rel (0) target = $region17
    $region16: #{encoder_forward.2} parent=1 // pred_region
      %49 = dma.done [#allocation4], 1024
    $region17: #{encoder_forward.2} parent=1 // pred_fallthru
      _
    // Predicated region
    $region18: #{encoder_forward.2} parent=1 // pred_check
      _
    $region19: #{encoder_forward.2} parent=1 // pred_check_branch
      %51 = sbr.rel (0) target = $region21
    $region20: #{encoder_forward.2} parent=1 // pred_region
      %52 = dma.done [#allocation7], 2048
    $region21: #{encoder_forward.2} parent=1 // pred_fallthru
      _
    // Predicated region
    $region22: #{encoder_forward.2} parent=1 // pred_check
      _
    $region23: #{encoder_forward.2} parent=1 // pred_check_branch
      %54 = sbr.rel (0) target = $region25
    $region24: #{encoder_forward.2} parent=1 // pred_region
      %55 = dma.done [#allocation7], 1024
    $region25: #{encoder_forward.2} parent=1 // pred_fallthru
      _
    %p57 = scmp.eq.s32.totalorder 0, 0
    // Predicated region
    $region26: #{encoder_forward.2} parent=1 // pred_check
      %p58 = pneg %p57
    $region27: #{encoder_forward.2} parent=1 // pred_check_branch
      %60 = sbr.rel (%p58) target = $region29
    $region28: #{encoder_forward.2} parent=1 // pred_region
      %61 = vst [vmem:[#allocation2] sm:$0xff] 0.0
      %62 = vst [vmem:[#allocation2 + $0x8] sm:$0xff] 0.0
      %63 = vst [vmem:[#allocation2 + $0x10] sm:$0xff] 0.0
      %64 = vst [vmem:[#allocation2 + $0x18] sm:$0xff] 0.0
      %65 = vst [vmem:[#allocation2 + $0x20] sm:$0xff] 0.0
      %66 = vst [vmem:[#allocation2 + $0x28] sm:$0xff] 0.0
      %67 = vst [vmem:[#allocation2 + $0x30] sm:$0xff] 0.0
      %68 = vst [vmem:[#allocation2 + $0x38] sm:$0xff] 0.0
      %69 = vst [vmem:[#allocation2 + $0x40] sm:$0xff] 0.0
      %70 = vst [vmem:[#allocation2 + $0x48] sm:$0xff] 0.0
      %71 = vst [vmem:[#allocation2 + $0x50] sm:$0xff] 0.0
      %72 = vst [vmem:[#allocation2 + $0x58] sm:$0xff] 0.0
      %73 = vst [vmem:[#allocation2 + $0x60] sm:$0xff] 0.0
      %74 = vst [vmem:[#allocation2 + $0x68] sm:$0xff] 0.0
      %75 = vst [vmem:[#allocation2 + $0x70] sm:$0xff] 0.0
      %76 = vst [vmem:[#allocation2 + $0x78] sm:$0xff] 0.0
    $region29: #{encoder_forward.2} parent=1 // pred_fallthru
      _
    %v77 = vld [vmem:[#allocation2] sm:$0xff]
    %v78 = vld [vmem:[#allocation2 + $0x8] sm:$0xff]
    %v79 = vld [vmem:[#allocation2 + $0x10] sm:$0xff]
    %v80 = vld [vmem:[#allocation2 + $0x18] sm:$0xff]
    %v81 = vld [vmem:[#allocation2 + $0x20] sm:$0xff]
    %v82 = vld [vmem:[#allocation2 + $0x28] sm:$0xff]
    %v83 = vld [vmem:[#allocation2 + $0x30] sm:$0xff]
    %v84 = vld [vmem:[#allocation2 + $0x38] sm:$0xff]
    %v85 = vld [vmem:[#allocation2 + $0x40] sm:$0xff]
    %v86 = vld [vmem:[#allocation2 + $0x48] sm:$0xff]
    %v87 = vld [vmem:[#allocation2 + $0x50] sm:$0xff]
    %v88 = vld [vmem:[#allocation2 + $0x58] sm:$0xff]
    %v89 = vld [vmem:[#allocation2 + $0x60] sm:$0xff]
    %v90 = vld [vmem:[#allocation2 + $0x68] sm:$0xff]
    %v91 = vld [vmem:[#allocation2 + $0x70] sm:$0xff]
    %v92 = vld [vmem:[#allocation2 + $0x78] sm:$0xff]
    %v93 = vld [vmem:[#allocation3] sm:$0xf]
    %v94 = vld [vmem:[#allocation3 + $0x4] sm:$0xf]
    %v95 = vld [vmem:[#allocation3 + $0x8] sm:$0xf]
    %v96 = vld [vmem:[#allocation3 + $0xc] sm:$0xf]
    %v97 = vld [vmem:[#allocation3 + $0x10] sm:$0xf]
    %v98 = vld [vmem:[#allocation3 + $0x14] sm:$0xf]
    %v99 = vld [vmem:[#allocation3 + $0x18] sm:$0xf]
    %v100 = vld [vmem:[#allocation3 + $0x1c] sm:$0xf]
    %v101 = vld [vmem:[#allocation3 + $0x20] sm:$0xf]
    %v102 = vld [vmem:[#allocation3 + $0x24] sm:$0xf]
    %v103 = vld [vmem:[#allocation3 + $0x28] sm:$0xf]
    %v104 = vld [vmem:[#allocation3 + $0x2c] sm:$0xf]
    %v105 = vld [vmem:[#allocation3 + $0x30] sm:$0xf]
    %v106 = vld [vmem:[#allocation3 + $0x34] sm:$0xf]
    %v107 = vld [vmem:[#allocation3 + $0x38] sm:$0xf]
    %v108 = vld [vmem:[#allocation3 + $0x3c] sm:$0xf]
    %v109 = vld [vmem:[#allocation6] sm:$0xff]
    %v110 = vld [vmem:[#allocation6 + $0x8] sm:$0xff]
    %v111 = vld [vmem:[#allocation6 + $0x10] sm:$0xff]
    %v112 = vld [vmem:[#allocation6 + $0x18] sm:$0xff]
    %v113 = vld [vmem:[#allocation6 + $0x20] sm:$0xff]
    %v114 = vld [vmem:[#allocation6 + $0x28] sm:$0xff]
    %v115 = vld [vmem:[#allocation6 + $0x30] sm:$0xff]
    %v116 = vld [vmem:[#allocation6 + $0x38] sm:$0xff]
    %v117 = vld [vmem:[#allocation6 + $0x40] sm:$0xff]
    %v118 = vld [vmem:[#allocation6 + $0x48] sm:$0xff]
    %v119 = vld [vmem:[#allocation6 + $0x50] sm:$0xff]
    %v120 = vld [vmem:[#allocation6 + $0x58] sm:$0xff]
    %v121 = vld [vmem:[#allocation6 + $0x60] sm:$0xff]
    %v122 = vld [vmem:[#allocation6 + $0x68] sm:$0xff]
    %v123 = vld [vmem:[#allocation6 + $0x70] sm:$0xff]
    %v124 = vld [vmem:[#allocation6 + $0x78] sm:$0xff]
    %v125 = vpack.c.bf16 %v110, %v109
    %v126 = vpack.c.bf16 %v112, %v111
    %v127 = vpack.c.bf16 %v114, %v113
    %v128 = vpack.c.bf16 %v116, %v115
    %v129 = vpack.c.bf16 %v118, %v117
    %v130 = vpack.c.bf16 %v120, %v119
    %v131 = vpack.c.bf16 %v122, %v121
    %v132 = vpack.c.bf16 %v124, %v123
    %v149 = vunpack.c.l.b16 %v93
    %v150 = vunpack.c.l.b16 %v94
    %v151 = vunpack.c.l.b16 %v95
    %v152 = vunpack.c.l.b16 %v96
    %v153 = vunpack.c.l.b16 %v97
    %v154 = vunpack.c.l.b16 %v98
    %v155 = vunpack.c.l.b16 %v99
    %v156 = vunpack.c.l.b16 %v100
    %v157 = vunpack.c.l.b16 %v101
    %v158 = vunpack.c.l.b16 %v102
    %v159 = vunpack.c.l.b16 %v103
    %v160 = vunpack.c.l.b16 %v104
    %v161 = vunpack.c.l.b16 %v105
    %v162 = vunpack.c.l.b16 %v106
    %v163 = vunpack.c.l.b16 %v107
    %v164 = vunpack.c.l.b16 %v108
    %v165 = vpack.c.b16 %v150, %v149
    %v166 = vpack.c.b16 %v152, %v151
    %v167 = vpack.c.b16 %v154, %v153
    %v168 = vpack.c.b16 %v156, %v155
    %v169 = vpack.c.b16 %v158, %v157
    %v170 = vpack.c.b16 %v160, %v159
    %v171 = vpack.c.b16 %v162, %v161
    %v172 = vpack.c.b16 %v164, %v163
    %181 = vmatprep.subr.bf16.mxu0 0
    %182 = vmatpush1.bf16.msra.mxu0 %v125
    %183 = vmatprep.subr.bf16.mxu0 0
    %184 = vmatpush1.bf16.msra.mxu0 %v126
    %185 = vmatprep.subr.bf16.mxu0 0
    %186 = vmatpush1.bf16.msra.mxu0 %v127
    %187 = vmatprep.subr.bf16.mxu0 0
    %188 = vmatpush1.bf16.msra.mxu0 %v128
    %189 = vmatprep.subr.bf16.mxu0 0
    %190 = vmatpush1.bf16.msra.mxu0 %v129
    %191 = vmatprep.subr.bf16.mxu0 0
    %192 = vmatpush1.bf16.msra.mxu0 %v130
    %193 = vmatprep.subr.bf16.mxu0 0
    %194 = vmatpush1.bf16.msra.mxu0 %v131
    %195 = vmatprep.subr.bf16.mxu0 0
    %196 = vmatpush1.bf16.msra.mxu0 %v132
    %197 = vmatprep.subr.bf16.mxu0 0
    %198 = vmatpush1.bf16.msra.mxu0 0
    %199 = vmatprep.subr.bf16.mxu0 0
    %200 = vmatpush1.bf16.msra.mxu0 0
    %201 = vmatprep.subr.bf16.mxu0 0
    %202 = vmatpush1.bf16.msra.mxu0 0
    %203 = vmatprep.subr.bf16.mxu0 0
    %204 = vmatpush1.bf16.msra.mxu0 0
    %205 = vmatprep.subr.bf16.mxu0 0
    %206 = vmatpush1.bf16.msra.mxu0 0
    %207 = vmatprep.subr.bf16.mxu0 0
    %208 = vmatpush1.bf16.msra.mxu0 0
    %209 = vmatprep.subr.bf16.mxu0 0
    %210 = vmatpush1.bf16.msra.mxu0 0
    %211 = vmatprep.subr.bf16.mxu0 0
    %212 = vmatpush1.bf16.msra.mxu0 0
    %213 = vmatprep.mubr.bf16.mxu0 0
    %214 = vmatmul.mubr.bf16.gmra.mrb[0].mxu0 %v165
    %v215 = vpop.f32.mrb[0].mxu0
    %v216 = vadd.f32 0.0, %v215
    %v217 = vpop.f32.mrb[0].mxu0
    %v218 = vpop.f32.mrb[0].mxu0
    %v219 = vadd.f32 0.0, %v218
    %v220 = vpop.f32.mrb[0].mxu0
    %221 = vmatprep.mubr.bf16.mxu0 0
    %222 = vmatmul.mubr.bf16.gmra.mrb[0].mxu0 %v166
    %v223 = vpop.f32.mrb[0].mxu0
    %v224 = vadd.f32 0.0, %v223
    %v225 = vpop.f32.mrb[0].mxu0
    %v226 = vpop.f32.mrb[0].mxu0
    %v227 = vadd.f32 0.0, %v226
    %v228 = vpop.f32.mrb[0].mxu0
    %229 = vmatprep.mubr.bf16.mxu0 0
    %230 = vmatmul.mubr.bf16.gmra.mrb[0].mxu0 %v167
    %v231 = vpop.f32.mrb[0].mxu0
    %v232 = vadd.f32 0.0, %v231
    %v233 = vpop.f32.mrb[0].mxu0
    %v234 = vpop.f32.mrb[0].mxu0
    %v235 = vadd.f32 0.0, %v234
    %v236 = vpop.f32.mrb[0].mxu0
    %237 = vmatprep.mubr.bf16.mxu0 0
    %238 = vmatmul.mubr.bf16.gmra.mrb[0].mxu0 %v168
    %v239 = vpop.f32.mrb[0].mxu0
    %v240 = vadd.f32 0.0, %v239
    %v241 = vpop.f32.mrb[0].mxu0
    %v242 = vpop.f32.mrb[0].mxu0
    %v243 = vadd.f32 0.0, %v242
    %v244 = vpop.f32.mrb[0].mxu0
    %245 = vmatprep.mubr.bf16.mxu0 0
    %246 = vmatmul.mubr.bf16.gmra.mrb[0].mxu0 %v169
    %v247 = vpop.f32.mrb[0].mxu0
    %v248 = vadd.f32 0.0, %v247
    %v249 = vpop.f32.mrb[0].mxu0
    %v250 = vpop.f32.mrb[0].mxu0
    %v251 = vadd.f32 0.0, %v250
    %v252 = vpop.f32.mrb[0].mxu0
    %253 = vmatprep.mubr.bf16.mxu0 0
    %254 = vmatmul.mubr.bf16.gmra.mrb[0].mxu0 %v170
    %v255 = vpop.f32.mrb[0].mxu0
    %v256 = vadd.f32 0.0, %v255
    %v257 = vpop.f32.mrb[0].mxu0
    %v258 = vpop.f32.mrb[0].mxu0
    %v259 = vadd.f32 0.0, %v258
    %v260 = vpop.f32.mrb[0].mxu0
    %261 = vmatprep.mubr.bf16.mxu0 0
    %262 = vmatmul.mubr.bf16.gmra.mrb[0].mxu0 %v171
    %v263 = vpop.f32.mrb[0].mxu0
    %v264 = vadd.f32 0.0, %v263
    %v265 = vpop.f32.mrb[0].mxu0
    %v266 = vpop.f32.mrb[0].mxu0
    %v267 = vadd.f32 0.0, %v266
    %v268 = vpop.f32.mrb[0].mxu0
    %269 = vmatprep.mubr.bf16.mxu0 0
    %270 = vmatmul.mubr.bf16.gmra.mrb[0].mxu0 %v172
    %v271 = vpop.f32.mrb[0].mxu0
    %v272 = vadd.f32 0.0, %v271
    %v273 = vpop.f32.mrb[0].mxu0
    %v274 = vpop.f32.mrb[0].mxu0
    %v275 = vadd.f32 0.0, %v274
    %v276 = vpop.f32.mrb[0].mxu0
    %277 = vdwg.mxu0
    %v278 = vadd.f32 %v77, %v216
    %v279 = vadd.f32 %v78, %v219
    %v280 = vadd.f32 %v79, %v224
    %v281 = vadd.f32 %v80, %v227
    %v282 = vadd.f32 %v81, %v232
    %v283 = vadd.f32 %v82, %v235
    %v284 = vadd.f32 %v83, %v240
    %v285 = vadd.f32 %v84, %v243
    %v286 = vadd.f32 %v85, %v248
    %v287 = vadd.f32 %v86, %v251
    %v288 = vadd.f32 %v87, %v256
    %v289 = vadd.f32 %v88, %v259
    %v290 = vadd.f32 %v89, %v264
    %v291 = vadd.f32 %v90, %v267
    %v292 = vadd.f32 %v91, %v272
    %v293 = vadd.f32 %v92, %v275
    %294 = vst [vmem:[#allocation2] sm:$0xff] %v278
    %295 = vst [vmem:[#allocation2 + $0x8] sm:$0xff] %v279
    %296 = vst [vmem:[#allocation2 + $0x10] sm:$0xff] %v280
    %297 = vst [vmem:[#allocation2 + $0x18] sm:$0xff] %v281
    %298 = vst [vmem:[#allocation2 + $0x20] sm:$0xff] %v282
    %299 = vst [vmem:[#allocation2 + $0x28] sm:$0xff] %v283
    %300 = vst [vmem:[#allocation2 + $0x30] sm:$0xff] %v284
    %301 = vst [vmem:[#allocation2 + $0x38] sm:$0xff] %v285
    %302 = vst [vmem:[#allocation2 + $0x40] sm:$0xff] %v286
    %303 = vst [vmem:[#allocation2 + $0x48] sm:$0xff] %v287
    %304 = vst [vmem:[#allocation2 + $0x50] sm:$0xff] %v288
    %305 = vst [vmem:[#allocation2 + $0x58] sm:$0xff] %v289
    %306 = vst [vmem:[#allocation2 + $0x60] sm:$0xff] %v290
    %307 = vst [vmem:[#allocation2 + $0x68] sm:$0xff] %v291
    %308 = vst [vmem:[#allocation2 + $0x70] sm:$0xff] %v292
    %309 = vst [vmem:[#allocation2 + $0x78] sm:$0xff] %v293
    // Predicated region
    $region30: #{encoder_forward.2} parent=1 // pred_check
      %p310 = pneg %p57
    $region31: #{encoder_forward.2} parent=1 // pred_check_branch
      %312 = sbr.rel (%p310) target = $region33
    $region32: #{encoder_forward.2} parent=1 // pred_region
      %v313 = vld [vmem:[#allocation2] sm:$0xff]
      %v314 = vld [vmem:[#allocation2 + $0x8] sm:$0xff]
      %v315 = vld [vmem:[#allocation2 + $0x10] sm:$0xff]
      %v316 = vld [vmem:[#allocation2 + $0x18] sm:$0xff]
      %v317 = vld [vmem:[#allocation2 + $0x20] sm:$0xff]
      %v318 = vld [vmem:[#allocation2 + $0x28] sm:$0xff]
      %v319 = vld [vmem:[#allocation2 + $0x30] sm:$0xff]
      %v320 = vld [vmem:[#allocation2 + $0x38] sm:$0xff]
      %v321 = vld [vmem:[#allocation2 + $0x40] sm:$0xff]
      %v322 = vld [vmem:[#allocation2 + $0x48] sm:$0xff]
      %v323 = vld [vmem:[#allocation2 + $0x50] sm:$0xff]
      %v324 = vld [vmem:[#allocation2 + $0x58] sm:$0xff]
      %v325 = vld [vmem:[#allocation2 + $0x60] sm:$0xff]
      %v326 = vld [vmem:[#allocation2 + $0x68] sm:$0xff]
      %v327 = vld [vmem:[#allocation2 + $0x70] sm:$0xff]
      %v328 = vld [vmem:[#allocation2 + $0x78] sm:$0xff]
      %v329 = vpack.c.bf16 %v314, %v313
      %v330 = vpack.c.bf16 %v316, %v315
      %v331 = vpack.c.bf16 %v318, %v317
      %v332 = vpack.c.bf16 %v320, %v319
      %v333 = vpack.c.bf16 %v322, %v321
      %v334 = vpack.c.bf16 %v324, %v323
      %v335 = vpack.c.bf16 %v326, %v325
      %v336 = vpack.c.bf16 %v328, %v327
      %v337 = vld [vmem:[#allocation8] sm:$0xf]
      %v338 = vld [vmem:[#allocation8 + $0x4] sm:$0xf]
      %v339 = vld [vmem:[#allocation8 + $0x8] sm:$0xf]
      %v340 = vld [vmem:[#allocation8 + $0xc] sm:$0xf]
      %v341 = vld [vmem:[#allocation8 + $0x10] sm:$0xf]
      %v342 = vld [vmem:[#allocation8 + $0x14] sm:$0xf]
      %v343 = vld [vmem:[#allocation8 + $0x18] sm:$0xf]
      %v344 = vld [vmem:[#allocation8 + $0x1c] sm:$0xf]
      %v345 = vld [vmem:[#allocation8 + $0x20] sm:$0xf]
      %v346 = vld [vmem:[#allocation8 + $0x24] sm:$0xf]
      %v347 = vld [vmem:[#allocation8 + $0x28] sm:$0xf]
      %v348 = vld [vmem:[#allocation8 + $0x2c] sm:$0xf]
      %v349 = vld [vmem:[#allocation8 + $0x30] sm:$0xf]
      %v350 = vld [vmem:[#allocation8 + $0x34] sm:$0xf]
      %v351 = vld [vmem:[#allocation8 + $0x38] sm:$0xf]
      %v352 = vld [vmem:[#allocation8 + $0x3c] sm:$0xf]
      %v369 = vunpack.c.l.b16 %v337
      %v370 = vunpack.c.l.b16 %v338
      %v371 = vunpack.c.l.b16 %v339
      %v372 = vunpack.c.l.b16 %v340
      %v373 = vunpack.c.l.b16 %v341
      %v374 = vunpack.c.l.b16 %v342
      %v375 = vunpack.c.l.b16 %v343
      %v376 = vunpack.c.l.b16 %v344
      %v377 = vunpack.c.l.b16 %v345
      %v378 = vunpack.c.l.b16 %v346
      %v379 = vunpack.c.l.b16 %v347
      %v380 = vunpack.c.l.b16 %v348
      %v381 = vunpack.c.l.b16 %v349
      %v382 = vunpack.c.l.b16 %v350
      %v383 = vunpack.c.l.b16 %v351
      %v384 = vunpack.c.l.b16 %v352
      %v385 = vpack.c.b16 %v370, %v369
      %v386 = vpack.c.b16 %v372, %v371
      %v387 = vpack.c.b16 %v374, %v373
      %v388 = vpack.c.b16 %v376, %v375
      %v389 = vpack.c.b16 %v378, %v377
      %v390 = vpack.c.b16 %v380, %v379
      %v391 = vpack.c.b16 %v382, %v381
      %v392 = vpack.c.b16 %v384, %v383
      %401 = vmatprep.subr.bf16.mxu0 0
      %402 = vmatpush1.bf16.msra.mxu0 %v385
      %403 = vmatprep.subr.bf16.mxu0 0
      %404 = vmatpush1.bf16.msra.mxu0 %v386
      %405 = vmatprep.subr.bf16.mxu0 0
      %406 = vmatpush1.bf16.msra.mxu0 %v387
      %407 = vmatprep.subr.bf16.mxu0 0
      %408 = vmatpush1.bf16.msra.mxu0 %v388
      %409 = vmatprep.subr.bf16.mxu0 0
      %410 = vmatpush1.bf16.msra.mxu0 %v389
      %411 = vmatprep.subr.bf16.mxu0 0
      %412 = vmatpush1.bf16.msra.mxu0 %v390
      %413 = vmatprep.subr.bf16.mxu0 0
      %414 = vmatpush1.bf16.msra.mxu0 %v391
      %415 = vmatprep.subr.bf16.mxu0 0
      %416 = vmatpush1.bf16.msra.mxu0 %v392
      %417 = vmatprep.subr.bf16.mxu0 0
      %418 = vmatpush1.bf16.msra.mxu0 0
      %419 = vmatprep.subr.bf16.mxu0 0
      %420 = vmatpush1.bf16.msra.mxu0 0
      %421 = vmatprep.subr.bf16.mxu0 0
      %422 = vmatpush1.bf16.msra.mxu0 0
      %423 = vmatprep.subr.bf16.mxu0 0
      %424 = vmatpush1.bf16.msra.mxu0 0
      %425 = vmatprep.subr.bf16.mxu0 0
      %426 = vmatpush1.bf16.msra.mxu0 0
      %427 = vmatprep.subr.bf16.mxu0 0
      %428 = vmatpush1.bf16.msra.mxu0 0
      %429 = vmatprep.subr.bf16.mxu0 0
      %430 = vmatpush1.bf16.msra.mxu0 0
      %431 = vmatprep.subr.bf16.mxu0 0
      %432 = vmatpush1.bf16.msra.mxu0 0
      %433 = vmatprep.mubr.bf16.mxu0 0
      %434 = vmatmul.mubr.bf16.gmra.mrb[0].mxu0 %v329
      %v435 = vpop.f32.mrb[0].mxu0
      %v436 = vadd.f32 0.0, %v435
      %v437 = vpop.f32.mrb[0].mxu0
      %v438 = vpop.f32.mrb[0].mxu0
      %v439 = vadd.f32 0.0, %v438
      %v440 = vpop.f32.mrb[0].mxu0
      %441 = vmatprep.mubr.bf16.mxu0 0
      %442 = vmatmul.mubr.bf16.gmra.mrb[0].mxu0 %v330
      %v443 = vpop.f32.mrb[0].mxu0
      %v444 = vadd.f32 0.0, %v443
      %v445 = vpop.f32.mrb[0].mxu0
      %v446 = vpop.f32.mrb[0].mxu0
      %v447 = vadd.f32 0.0, %v446
      %v448 = vpop.f32.mrb[0].mxu0
      %449 = vmatprep.mubr.bf16.mxu0 0
      %450 = vmatmul.mubr.bf16.gmra.mrb[0].mxu0 %v331
      %v451 = vpop.f32.mrb[0].mxu0
      %v452 = vadd.f32 0.0, %v451
      %v453 = vpop.f32.mrb[0].mxu0
      %v454 = vpop.f32.mrb[0].mxu0
      %v455 = vadd.f32 0.0, %v454
      %v456 = vpop.f32.mrb[0].mxu0
      %457 = vmatprep.mubr.bf16.mxu0 0
      %458 = vmatmul.mubr.bf16.gmra.mrb[0].mxu0 %v332
      %v459 = vpop.f32.mrb[0].mxu0
      %v460 = vadd.f32 0.0, %v459
      %v461 = vpop.f32.mrb[0].mxu0
      %v462 = vpop.f32.mrb[0].mxu0
      %v463 = vadd.f32 0.0, %v462
      %v464 = vpop.f32.mrb[0].mxu0
      %465 = vmatprep.mubr.bf16.mxu0 0
      %466 = vmatmul.mubr.bf16.gmra.mrb[0].mxu0 %v333
      %v467 = vpop.f32.mrb[0].mxu0
      %v468 = vadd.f32 0.0, %v467
      %v469 = vpop.f32.mrb[0].mxu0
      %v470 = vpop.f32.mrb[0].mxu0
      %v471 = vadd.f32 0.0, %v470
      %v472 = vpop.f32.mrb[0].mxu0
      %473 = vmatprep.mubr.bf16.mxu0 0
      %474 = vmatmul.mubr.bf16.gmra.mrb[0].mxu0 %v334
      %v475 = vpop.f32.mrb[0].mxu0
      %v476 = vadd.f32 0.0, %v475
      %v477 = vpop.f32.mrb[0].mxu0
      %v478 = vpop.f32.mrb[0].mxu0
      %v479 = vadd.f32 0.0, %v478
      %v480 = vpop.f32.mrb[0].mxu0
      %481 = vmatprep.mubr.bf16.mxu0 0
      %482 = vmatmul.mubr.bf16.gmra.mrb[0].mxu0 %v335
      %v483 = vpop.f32.mrb[0].mxu0
      %v484 = vadd.f32 0.0, %v483
      %v485 = vpop.f32.mrb[0].mxu0
      %v486 = vpop.f32.mrb[0].mxu0
      %v487 = vadd.f32 0.0, %v486
      %v488 = vpop.f32.mrb[0].mxu0
      %489 = vmatprep.mubr.bf16.mxu0 0
      %490 = vmatmul.mubr.bf16.gmra.mrb[0].mxu0 %v336
      %v491 = vpop.f32.mrb[0].mxu0
      %v492 = vadd.f32 0.0, %v491
      %v493 = vpop.f32.mrb[0].mxu0
      %v494 = vpop.f32.mrb[0].mxu0
      %v495 = vadd.f32 0.0, %v494
      %v496 = vpop.f32.mrb[0].mxu0
      %497 = vdwg.mxu0
      %v498 = vmax.f32 %v436, 0.0
      %v499 = vmax.f32 %v439, 0.0
      %v500 = vmax.f32 %v444, 0.0
      %v501 = vmax.f32 %v447, 0.0
      %v502 = vmax.f32 %v452, 0.0
      %v503 = vmax.f32 %v455, 0.0
      %v504 = vmax.f32 %v460, 0.0
      %v505 = vmax.f32 %v463, 0.0
      %v506 = vmax.f32 %v468, 0.0
      %v507 = vmax.f32 %v471, 0.0
      %v508 = vmax.f32 %v476, 0.0
      %v509 = vmax.f32 %v479, 0.0
      %v510 = vmax.f32 %v484, 0.0
      %v511 = vmax.f32 %v487, 0.0
      %v512 = vmax.f32 %v492, 0.0
      %v513 = vmax.f32 %v495, 0.0
      %514 = vst [vmem:[#allocation9] sm:$0xff] %v498
      %515 = vst [vmem:[#allocation9 + $0x8] sm:$0xff] %v499
      %516 = vst [vmem:[#allocation9 + $0x10] sm:$0xff] %v500
      %517 = vst [vmem:[#allocation9 + $0x18] sm:$0xff] %v501
      %518 = vst [vmem:[#allocation9 + $0x20] sm:$0xff] %v502
      %519 = vst [vmem:[#allocation9 + $0x28] sm:$0xff] %v503
      %520 = vst [vmem:[#allocation9 + $0x30] sm:$0xff] %v504
      %521 = vst [vmem:[#allocation9 + $0x38] sm:$0xff] %v505
      %522 = vst [vmem:[#allocation9 + $0x40] sm:$0xff] %v506
      %523 = vst [vmem:[#allocation9 + $0x48] sm:$0xff] %v507
      %524 = vst [vmem:[#allocation9 + $0x50] sm:$0xff] %v508
      %525 = vst [vmem:[#allocation9 + $0x58] sm:$0xff] %v509
      %526 = vst [vmem:[#allocation9 + $0x60] sm:$0xff] %v510
      %527 = vst [vmem:[#allocation9 + $0x68] sm:$0xff] %v511
      %528 = vst [vmem:[#allocation9 + $0x70] sm:$0xff] %v512
      %529 = vst [vmem:[#allocation9 + $0x78] sm:$0xff] %v513
    $region33: #{encoder_forward.2} parent=1 // pred_fallthru
      _
    // Predicated region
    $region34: #{encoder_forward.2} parent=1 // pred_check
      _
    $region35: #{encoder_forward.2} parent=1 // pred_check_branch
      %531 = sbr.rel (0) target = $region37
    $region36: #{encoder_forward.2} parent=1 // pred_region
      %s533 = ssub.s32 2048, 2048
      %534 = vsyncadd [#allocation5], %s533
      %s535 = sshll.u32 [#allocation9], 4
      %s536 = int_to_ptr.vmem [resolvable:$true] %s535
      %541 = dma.vmem_to_hbm [thread:$0]  %s536, 2048, %s3, [#allocation5], 128, 128, 8
    $region37: #{encoder_forward.2} parent=1 // pred_fallthru
      _
    // Predicated region
    $region38: #{encoder_forward.2} parent=1 // pred_check
      _
    $region39: #{encoder_forward.2} parent=1 // pred_check_branch
      %543 = sbr.rel (0) target = $region41
    $region40: #{encoder_forward.2} parent=1 // pred_region
      %544 = dma.done [#allocation5], 2048
    $region41: #{encoder_forward.2} parent=1 // pred_fallthru
      _
    %545 = vsyncpa [#allocation4], 1
    %546 = vsyncpa [#allocation7], 1
    %547 = vsyncpa [#allocation5], 1

</llo_original>
